<compile_context>
chip_gen: v7x
topology: tpu7x:2x2x1
jax: 0.10.0
libtpu: 0.0.40
codegen_flags: <defaults>
</compile_context>

<pallas_src>
import functools

import jax
import jax.numpy as jnp
from jax.experimental import pallas as pl
from jax.experimental.pallas import tpu as pltpu

LEAKY_SLOPE = 0.01  # nn.LeakyReLU default negative_slope


def _round_up(x, m):
    return ((x + m - 1) // m) * m


def _leaky_relu(x):
    return jnp.where(x > 0, x, LEAKY_SLOPE * x)


def _policy_kernel(x_ref, w1_ref, b1_ref, w2_ref, b2_ref, w3_ref, b3_ref, out_ref):
    mm = w1_ref.dtype
    # Linear 1 + LeakyReLU (MXU operands in weight dtype, accumulate + elementwise in f32).
    x = x_ref[...].astype(mm)  # f32 streamed from HBM, cast in-kernel (VPU, effectively free)
    h = jnp.dot(x, w1_ref[...], preferred_element_type=jnp.float32)
    h = _leaky_relu(h + b1_ref[...])
    # Linear 2 + LeakyReLU.
    h = jnp.dot(h.astype(mm), w2_ref[...], preferred_element_type=jnp.float32)
    h = _leaky_relu(h + b2_ref[...])
    # Linear 3 -> logits (tb, dim_action); softmax math stays in f32.
    logits = jnp.dot(h.astype(mm), w3_ref[...], preferred_element_type=jnp.float32)
    logits = logits + b3_ref[...]
    m = jnp.max(logits, axis=-1, keepdims=True)
    e = jnp.exp(logits - m)
    denom = jnp.sum(e, axis=-1, keepdims=True)
    # Exact reciprocal keeps sum(probs) == 1 to ~1e-7 (approx=True would break that).
    out_ref[...] = (e * pl.reciprocal(denom, approx=False)).astype(out_ref.dtype)


def prepare_policy_params(params, matmul_dtype=jnp.bfloat16):
    """One-time per-policy prep (hoisted out of the hot path): cast weights to the MXU
    dtype, keep biases in f32 with shape (1, n)."""
    w1, b1, w2, b2, w3, b3 = params
    mm = jnp.dtype(matmul_dtype)
    return (w1.astype(mm), jnp.asarray(b1, jnp.float32).reshape(1, -1),
            w2.astype(mm), jnp.asarray(b2, jnp.float32).reshape(1, -1),
            w3.astype(mm), jnp.asarray(b3, jnp.float32).reshape(1, -1))


def _vmem_row_cap(dim_state, H, A, mm_itemsize, budget_bytes):
    # Rough per-grid-step VMEM model: double-buffered x + out blocks (f32) plus
    # ~4 tb*H f32-equivalent compiler-managed intermediates (h1/h2 + their mm-dtype copies).
    per_row = 2 * dim_state * 4 + 2 * A * 4 + 16 * H
    fixed = 2 * ((dim_state * H + H * H + H * A) * mm_itemsize + (2 * H + A) * 4)
    return max(8, ((budget_bytes - fixed) // per_row) // 8 * 8)


@functools.partial(jax.jit, static_argnames=("block_batch",))
def discrete_policy_probs(x, prepared_params, *, block_batch=4096):
    """Action probabilities of DiscretePolicy.forward's Categorical distribution.

    `prepared_params` comes from prepare_policy_params(); x is [B, dim_state] float32.
    """
    w1, b1, w2, b2, w3, b3 = prepared_params
    B, dim_state = x.shape
    H = w1.shape[1]
    A = w3.shape[1]
    mm_itemsize = jnp.dtype(w1.dtype).itemsize

    # --- batch tile selection -------------------------------------------------
    b_rounded = _round_up(B, 8)
    tb = min(_round_up(block_batch, 8), b_rounded)
    if b_rounded >= 16:
        # Guarantee >= 2 grid steps so ("parallel",) shards across both v7x TensorCores.
        tb = min(tb, _round_up(b_rounded // 2, 8))
    # Stay well inside the smallest scoped-VMEM budget across v5e/v6e/v7x.
    tb = min(tb, _vmem_row_cap(dim_state, H, A, mm_itemsize,
                               budget_bytes=24 * 1024 * 1024))
    tb = max(tb, 8)

    grid_b = pl.cdiv(B, tb)
    b_pad = grid_b * tb
    if b_pad != B:
        # Ragged batch only: pad with zero rows (softmax of zeros is finite; rows sliced off).
        x = jnp.pad(x, ((0, b_pad - B), (0, 0)))

    flops = 2 * b_pad * (dim_state * H + H * H + H * A)
    bytes_accessed = (
        b_pad * dim_state * 4                       # streamed f32 input
        + b_pad * A * 4                             # f32 output (no lane padding)
        + (w1.size + w2.size + w3.size) * mm_itemsize
        + (b1.size + b2.size + b3.size) * 4)

    out = pl.pallas_call(
        _policy_kernel,
        out_shape=jax.ShapeDtypeStruct((b_pad, A), jnp.float32),
        grid=(grid_b,),
        in_specs=[
            pl.BlockSpec((tb, dim_state), lambda i: (i, 0)),  # x: one batch tile per step
            pl.BlockSpec((dim_state, H), lambda i: (0, 0)),   # weights/biases: VMEM-resident
            pl.BlockSpec((1, H), lambda i: (0, 0)),
            pl.BlockSpec((H, H), lambda i: (0, 0)),
            pl.BlockSpec((1, H), lambda i: (0, 0)),
            pl.BlockSpec((H, A), lambda i: (0, 0)),
            pl.BlockSpec((1, A), lambda i: (0, 0)),
        ],
        out_specs=pl.BlockSpec((tb, A), lambda i: (i, 0)),    # last dim == full array dim
        compiler_params=pltpu.CompilerParams(
            dimension_semantics=("parallel",),        # v7x megacore; no-op on v5e/v6e
            vmem_limit_bytes=32 * 1024 * 1024),       # safe ceiling on all generations
        cost_estimate=pl.CostEstimate(
            flops=flops,
            transcendentals=b_pad * A,
            bytes_accessed=bytes_accessed),
    )(x, w1, b1, w2, b2, w3, b3)

    return out if b_pad == B else out[:B]


# ----------------------------- reference / init --------------------------------

def _xavier_normal(key, fan_in, fan_out, dtype=jnp.float32):
    # torch.nn.init.xavier_normal_: std = gain * sqrt(2 / (fan_in + fan_out)), gain=1
    std = (2.0 / (fan_in + fan_out)) ** 0.5
    return std * jax.random.normal(key, (fan_in, fan_out), dtype=dtype)


def init_discrete_policy_params(key, dim_state, dim_action, dim_hidden=128):
    k1, k2, k3 = jax.random.split(key, 3)
    return (_xavier_normal(k1, dim_state, dim_hidden), jnp.zeros((dim_hidden,), jnp.float32),
            _xavier_normal(k2, dim_hidden, dim_hidden), jnp.zeros((dim_hidden,), jnp.float32),
            _xavier_normal(k3, dim_hidden, dim_action), jnp.zeros((dim_action,), jnp.float32))


def ref_probs(x, params, matmul_dtype=jnp.bfloat16):
    """Plain-JAX reference with the same mixed-precision recipe as the kernel."""
    w1, b1, w2, b2, w3, b3 = params
    mm = jnp.dtype(matmul_dtype)
    h = jnp.dot(x.astype(mm), w1.astype(mm), preferred_element_type=jnp.float32)
    h = _leaky_relu(h + b1.reshape(1, -1))
    h = jnp.dot(h.astype(mm), w2.astype(mm), preferred_element_type=jnp.float32)
    h = _leaky_relu(h + b2.reshape(1, -1))
    logits = jnp.dot(h.astype(mm), w3.astype(mm), preferred_element_type=jnp.float32)
    logits = logits + b3.reshape(1, -1)
    return jax.nn.softmax(logits, axis=-1)


if __name__ == "__main__":
    key = jax.random.PRNGKey(0)
    k_params, k_x, k_x2 = jax.random.split(key, 3)

    batch = 8
    dim_state = 16
    dim_hidden = 128   # module default
    dim_action = 8

    params = init_discrete_policy_params(k_params, dim_state, dim_action, dim_hidden)
    x = jax.random.normal(k_x, (batch, dim_state), dtype=jnp.float32)

    # Production path: bf16 MXU operands, f32 accumulation / softmax / output.
    prepped_bf16 = prepare_policy_params(params, jnp.bfloat16)
    probs = jax.block_until_ready(discrete_policy_probs(x, prepped_bf16))
    expected = ref_probs(x, params, matmul_dtype=jnp.bfloat16)
    assert probs.shape == (batch, dim_action)
    assert jnp.allclose(probs, expected, atol=2e-3, rtol=2e-3)
    assert jnp.allclose(jnp.sum(probs, axis=-1), 1.0, atol=1e-5)

    # Test-only f32 path at tight tolerance, exercising multi-tile grid + ragged batch.
    x2 = jax.random.normal(k_x2, (200, dim_state), dtype=jnp.float32)
    prepped_f32 = prepare_policy_params(params, jnp.float32)
    probs2 = jax.block_until_ready(
        discrete_policy_probs(x2, prepped_f32, block_batch=64))
    expected2 = ref_probs(x2, params, matmul_dtype=jnp.float32)
    assert probs2.shape == (200, dim_action)
    assert jnp.allclose(probs2, expected2, atol=1e-5, rtol=1e-5)
    assert jnp.allclose(jnp.sum(probs2, axis=-1), 1.0, atol=1e-5)

    # TODO(synk): Categorical sampling / log_prob / entropy / KL of the returned
    # distribution are thin wrappers over `probs` and stay in plain JAX (no hot-path benefit).
    print("KERNEL_OK")
</pallas_src>

<mosaic_0001>
module attributes {stable_mosaic.version = 11 : i64} {
  func.func @_policy_kernel(%arg0: i32, %arg1: memref<8x16xf32, #tpu.memory_space<vmem>>, %arg2: memref<16x128xbf16, #tpu.memory_space<vmem>>, %arg3: memref<1x128xf32, #tpu.memory_space<vmem>>, %arg4: memref<128x128xbf16, #tpu.memory_space<vmem>>, %arg5: memref<1x128xf32, #tpu.memory_space<vmem>>, %arg6: memref<128x8xbf16, #tpu.memory_space<vmem>>, %arg7: memref<1x8xf32, #tpu.memory_space<vmem>>, %arg8: memref<8x8xf32, #tpu.memory_space<vmem>>) attributes {dimension_semantics = [#tpu.dimension_semantics<parallel>], iteration_bounds = array<i64: 1>, scalar_prefetch = 0 : i64, scratch_operands = 0 : i64, tpu.core_type = #tpu.core_type<tc>, window_params = [{transform_indices = @transform_0, window_bounds = array<i64: 8, 16>}, {pipeline_mode = #tpu.pipeline_mode<synchronous>, transform_indices = @transform_1, window_bounds = array<i64: 16, 128>}, {pipeline_mode = #tpu.pipeline_mode<synchronous>, transform_indices = @transform_2, window_bounds = array<i64: 1, 128>}, {pipeline_mode = #tpu.pipeline_mode<synchronous>, transform_indices = @transform_3, window_bounds = array<i64: 128, 128>}, {pipeline_mode = #tpu.pipeline_mode<synchronous>, transform_indices = @transform_4, window_bounds = array<i64: 1, 128>}, {pipeline_mode = #tpu.pipeline_mode<synchronous>, transform_indices = @transform_5, window_bounds = array<i64: 128, 8>}, {pipeline_mode = #tpu.pipeline_mode<synchronous>, transform_indices = @transform_6, window_bounds = array<i64: 1, 8>}, {transform_indices = @transform_7, window_bounds = array<i64: 8, 8>}]} {
    %c0 = arith.constant 0 : index
    %c0_0 = arith.constant 0 : index
    %0 = vector.load %arg1[%c0, %c0_0] : memref<8x16xf32, #tpu.memory_space<vmem>>, vector<8x16xf32>
    %1 = arith.truncf %0 : vector<8x16xf32> to vector<8x16xbf16>
    %c0_1 = arith.constant 0 : index
    %c0_2 = arith.constant 0 : index
    %2 = vector.load %arg2[%c0_1, %c0_2] : memref<16x128xbf16, #tpu.memory_space<vmem>>, vector<16x128xbf16>
    %cst = arith.constant dense<0.000000e+00> : vector<8x128xf32>
    %3 = tpu.matmul %1, %2, %cst {dimension_numbers = #tpu.dot_dimension_numbers<[1], [0], [0], [1], [0, 0, 1, 1], [], []>} : vector<8x16xbf16>, vector<16x128xbf16>, vector<8x128xf32> -> vector<8x128xf32>
    %c0_3 = arith.constant 0 : index
    %c0_4 = arith.constant 0 : index
    %4 = vector.load %arg3[%c0_3, %c0_4] : memref<1x128xf32, #tpu.memory_space<vmem>>, vector<1x128xf32>
    %5 = vector.broadcast %4 : vector<1x128xf32> to vector<8x128xf32>
    %6 = arith.addf %3, %5 : vector<8x128xf32>
    %cst_5 = arith.constant 0.000000e+00 : f32
    %7 = vector.broadcast %cst_5 : f32 to vector<8x128xf32>
    %8 = arith.cmpf ogt, %6, %7 : vector<8x128xf32>
    %cst_6 = arith.constant 0.00999999977 : f32
    %9 = vector.broadcast %cst_6 : f32 to vector<8x128xf32>
    %10 = arith.mulf %9, %6 : vector<8x128xf32>
    %11 = arith.select %8, %6, %10 : vector<8x128xi1>, vector<8x128xf32>
    %12 = arith.truncf %11 : vector<8x128xf32> to vector<8x128xbf16>
    %c0_7 = arith.constant 0 : index
    %c0_8 = arith.constant 0 : index
    %13 = vector.load %arg4[%c0_7, %c0_8] : memref<128x128xbf16, #tpu.memory_space<vmem>>, vector<128x128xbf16>
    %cst_9 = arith.constant dense<0.000000e+00> : vector<8x128xf32>
    %14 = tpu.matmul %12, %13, %cst_9 {dimension_numbers = #tpu.dot_dimension_numbers<[1], [0], [0], [1], [0, 0, 1, 1], [], []>} : vector<8x128xbf16>, vector<128x128xbf16>, vector<8x128xf32> -> vector<8x128xf32>
    %c0_10 = arith.constant 0 : index
    %c0_11 = arith.constant 0 : index
    %15 = vector.load %arg5[%c0_10, %c0_11] : memref<1x128xf32, #tpu.memory_space<vmem>>, vector<1x128xf32>
    %16 = vector.broadcast %15 : vector<1x128xf32> to vector<8x128xf32>
    %17 = arith.addf %14, %16 : vector<8x128xf32>
    %cst_12 = arith.constant 0.000000e+00 : f32
    %18 = vector.broadcast %cst_12 : f32 to vector<8x128xf32>
    %19 = arith.cmpf ogt, %17, %18 : vector<8x128xf32>
    %cst_13 = arith.constant 0.00999999977 : f32
    %20 = vector.broadcast %cst_13 : f32 to vector<8x128xf32>
    %21 = arith.mulf %20, %17 : vector<8x128xf32>
    %22 = arith.select %19, %17, %21 : vector<8x128xi1>, vector<8x128xf32>
    %23 = arith.truncf %22 : vector<8x128xf32> to vector<8x128xbf16>
    %c0_14 = arith.constant 0 : index
    %c0_15 = arith.constant 0 : index
    %24 = vector.load %arg6[%c0_14, %c0_15] : memref<128x8xbf16, #tpu.memory_space<vmem>>, vector<128x8xbf16>
    %cst_16 = arith.constant dense<0.000000e+00> : vector<8x8xf32>
    %25 = tpu.matmul %23, %24, %cst_16 {dimension_numbers = #tpu.dot_dimension_numbers<[1], [0], [0], [1], [0, 0, 1, 1], [], []>} : vector<8x128xbf16>, vector<128x8xbf16>, vector<8x8xf32> -> vector<8x8xf32>
    %c0_17 = arith.constant 0 : index
    %c0_18 = arith.constant 0 : index
    %26 = vector.load %arg7[%c0_17, %c0_18] : memref<1x8xf32, #tpu.memory_space<vmem>>, vector<1x8xf32>
    %27 = vector.broadcast %26 : vector<1x8xf32> to vector<8x8xf32>
    %28 = arith.addf %25, %27 : vector<8x8xf32>
    %cst_19 = arith.constant dense<0xFF800000> : vector<8xf32>
    %29 = vector.multi_reduction <maximumf>, %28, %cst_19 [1] : vector<8x8xf32> to vector<8xf32>
    %30 = vector.shape_cast %29 : vector<8xf32> to vector<8x1xf32>
    %31 = vector.broadcast %30 : vector<8x1xf32> to vector<8x8xf32>
    %32 = arith.subf %28, %31 : vector<8x8xf32>
    %33 = math.exp %32 : vector<8x8xf32>
    %cst_20 = arith.constant dense<0.000000e+00> : vector<8xf32>
    %34 = vector.multi_reduction <add>, %33, %cst_20 [1] : vector<8x8xf32> to vector<8xf32>
    %35 = vector.shape_cast %34 : vector<8xf32> to vector<8x1xf32>
    %36 = tpu.reciprocal %35 : vector<8x1xf32> -> vector<8x1xf32>
    %37 = vector.broadcast %36 : vector<8x1xf32> to vector<8x8xf32>
    %38 = arith.mulf %33, %37 : vector<8x8xf32>
    %c0_21 = arith.constant 0 : index
    %c0_22 = arith.constant 0 : index
    %39 = vector.load %arg8[%c0_21, %c0_22] : memref<8x8xf32, #tpu.memory_space<vmem>>, vector<8x8xf32>
    tpu.vector_store %arg8[%c0_21, %c0_22], %38 {strides = array<i32>} : memref<8x8xf32, #tpu.memory_space<vmem>>, vector<8x8xf32>,
    return
  }
  func.func @transform_0(%arg0: i32) -> (i32, i32) {
    %c0_i32 = arith.constant 0 : i32
    %c0_i32_0 = arith.constant 0 : i32
    return %arg0, %c0_i32 : i32, i32
  }
  func.func @transform_1(%arg0: i32) -> (i32, i32) {
    %c0_i32 = arith.constant 0 : i32
    %c0_i32_0 = arith.constant 0 : i32
    %c0_i32_1 = arith.constant 0 : i32
    return %c0_i32, %c0_i32_0 : i32, i32
  }
  func.func @transform_2(%arg0: i32) -> (i32, i32) {
    %c0_i32 = arith.constant 0 : i32
    %c0_i32_0 = arith.constant 0 : i32
    %c0_i32_1 = arith.constant 0 : i32
    return %c0_i32, %c0_i32_0 : i32, i32
  }
  func.func @transform_3(%arg0: i32) -> (i32, i32) {
    %c0_i32 = arith.constant 0 : i32
    %c0_i32_0 = arith.constant 0 : i32
    %c0_i32_1 = arith.constant 0 : i32
    return %c0_i32, %c0_i32_0 : i32, i32
  }
  func.func @transform_4(%arg0: i32) -> (i32, i32) {
    %c0_i32 = arith.constant 0 : i32
    %c0_i32_0 = arith.constant 0 : i32
    %c0_i32_1 = arith.constant 0 : i32
    return %c0_i32, %c0_i32_0 : i32, i32
  }
  func.func @transform_5(%arg0: i32) -> (i32, i32) {
    %c0_i32 = arith.constant 0 : i32
    %c0_i32_0 = arith.constant 0 : i32
    %c0_i32_1 = arith.constant 0 : i32
    return %c0_i32, %c0_i32_0 : i32, i32
  }
  func.func @transform_6(%arg0: i32) -> (i32, i32) {
    %c0_i32 = arith.constant 0 : i32
    %c0_i32_0 = arith.constant 0 : i32
    %c0_i32_1 = arith.constant 0 : i32
    return %c0_i32, %c0_i32_0 : i32, i32
  }
  func.func @transform_7(%arg0: i32) -> (i32, i32) {
    %c0_i32 = arith.constant 0 : i32
    %c0_i32_0 = arith.constant 0 : i32
    return %arg0, %c0_i32 : i32, i32
  }
}

</mosaic_0001>

<llo_original>
// kernel: discrete_policy_probs.1
$region0: #{discrete_policy_probs.1}
  #allocation0 [shape = 'u32[]', space=smem, size = 0x4, offset = 0x4, fixed_abs, tag = 'smem constant byte address 0x4 - core index']
  #allocation1 [shape = 'u32[144,128]{1,0:T(1,128)}', space=vmem, size = 0x12000, scoped, tag = 'internal scratch']
  %s0 = inlined_call_operand.vmem [shape: f32[8,16], index: 0, kind: input, shape index: {}]
  %s1 = inlined_call_operand.hbm [shape: bf16[16,128], index: 1, kind: input, shape index: {}]
  %s2 = inlined_call_operand.vmem [shape: f32[1,128], index: 2, kind: input, shape index: {}]
  %s3 = inlined_call_operand.vmem [shape: bf16[128,128], index: 3, kind: input, shape index: {}]
  %s4 = inlined_call_operand.vmem [shape: f32[1,128], index: 4, kind: input, shape index: {}]
  %s5 = inlined_call_operand.vmem [shape: bf16[128,8], index: 5, kind: input, shape index: {}]
  %s6 = inlined_call_operand.vmem [shape: f32[1,8], index: 6, kind: input, shape index: {}]
  %s7 = inlined_call_operand.hbm [shape: f32[8,8], index: 7, kind: output, shape index: {}]
  %s8 = sld [smem:[#allocation0]]
  $region42: #{discrete_policy_probs.1} parent=0
    _
  %s10 = ssub.s32 1, %s8
  %s11 = scalar_select 0, %s10, %s8
  $region1: #{discrete_policy_probs.1} parent=0
    #allocation2 [shape = 'u8[4096]{0}', space=vmem, size = 0x1000, scoped, tag = 'input window, operand 1, single buffered']
    #allocation3 [shape = 's32[1]{0}', space=sflag, size = 0x4, scoped, tag = 'scoped memory for discrete_policy_probs.1']
    #allocation4 [shape = 's32[1]{0}', space=sflag, size = 0x4, scoped, tag = 'scoped memory for discrete_policy_probs.1']
    #allocation5 [shape = 'u8[4096]{0}', space=vmem, size = 0x1000, scoped, tag = 'output window, operand 0, single buffered']
    %12 = vsyncpa [#allocation3], 0
    %13 = vsyncpa [#allocation4], 0
    // Predicated region
    $region2: #{discrete_policy_probs.1} parent=1 // pred_check
      _
    $region3: #{discrete_policy_probs.1} parent=1 // pred_check_branch
      %15 = sbr.rel (0) target = $region5
    $region4: #{discrete_policy_probs.1} parent=1 // pred_region
      _
    $region5: #{discrete_policy_probs.1} parent=1 // pred_fallthru
      _
    // Predicated region
    $region6: #{discrete_policy_probs.1} parent=1 // pred_check
      _
    $region7: #{discrete_policy_probs.1} parent=1 // pred_check_branch
      %17 = sbr.rel (0) target = $region9
    $region8: #{discrete_policy_probs.1} parent=1 // pred_region
      %s19 = ssub.s32 128, 128
      %20 = vsyncadd [#allocation3], %s19
      %s21 = sshll.u32 [#allocation2], 4
      %s22 = int_to_ptr.vmem [resolvable:$true] %s21
      %27 = dma.hbm_to_vmem [thread:$0]  %s1, 128, %s22, [#allocation3], 64, 64, 4
    $region9: #{discrete_policy_probs.1} parent=1 // pred_fallthru
      _
    // Predicated region
    $region10: #{discrete_policy_probs.1} parent=1 // pred_check
      _
    $region11: #{discrete_policy_probs.1} parent=1 // pred_check_branch
      %29 = sbr.rel (0) target = $region13
    $region12: #{discrete_policy_probs.1} parent=1 // pred_region
      _
    $region13: #{discrete_policy_probs.1} parent=1 // pred_fallthru
      _
    // Predicated region
    $region14: #{discrete_policy_probs.1} parent=1 // pred_check
      _
    $region15: #{discrete_policy_probs.1} parent=1 // pred_check_branch
      %31 = sbr.rel (0) target = $region17
    $region16: #{discrete_policy_probs.1} parent=1 // pred_region
      _
    $region17: #{discrete_policy_probs.1} parent=1 // pred_fallthru
      _
    // Predicated region
    $region18: #{discrete_policy_probs.1} parent=1 // pred_check
      _
    $region19: #{discrete_policy_probs.1} parent=1 // pred_check_branch
      %33 = sbr.rel (0) target = $region21
    $region20: #{discrete_policy_probs.1} parent=1 // pred_region
      _
    $region21: #{discrete_policy_probs.1} parent=1 // pred_fallthru
      _
    // Predicated region
    $region22: #{discrete_policy_probs.1} parent=1 // pred_check
      _
    $region23: #{discrete_policy_probs.1} parent=1 // pred_check_branch
      %35 = sbr.rel (0) target = $region25
    $region24: #{discrete_policy_probs.1} parent=1 // pred_region
      _
    $region25: #{discrete_policy_probs.1} parent=1 // pred_fallthru
      _
    // Predicated region
    $region26: #{discrete_policy_probs.1} parent=1 // pred_check
      _
    $region27: #{discrete_policy_probs.1} parent=1 // pred_check_branch
      %37 = sbr.rel (0) target = $region29
    $region28: #{discrete_policy_probs.1} parent=1 // pred_region
      _
    $region29: #{discrete_policy_probs.1} parent=1 // pred_fallthru
      _
    // Predicated region
    $region30: #{discrete_policy_probs.1} parent=1 // pred_check
      _
    $region31: #{discrete_policy_probs.1} parent=1 // pred_check_branch
      %39 = sbr.rel (0) target = $region33
    $region32: #{discrete_policy_probs.1} parent=1 // pred_region
      %40 = dma.done [#allocation3], 128
    $region33: #{discrete_policy_probs.1} parent=1 // pred_fallthru
      _
    %v42 = vld [vmem:[%s0] sm:$0xff]
    %v43 = vpack.c.bf16 %v42, %v42
    %v44 = vld [vmem:[#allocation2] sm:$0xf]
    %v45 = vld [vmem:[#allocation2 + $0x4] sm:$0xf]
    %v46 = vld [vmem:[%s2] sm:$0x1]
    %v48 = vlaneseq
    %v49 = vshrl.u32 %v48, 7
    %v50 = vsub.s32 0, %v49
    %v51 = vrot.slane %v46, %v50
    %v55 = vunpack.c.l.b16 %v44
    %v56 = vunpack.c.l.b16 %v45
    %v57 = vpack.c.b16 %v56, %v55
    %vm59 = vcmask 130048
    %v61 = vsel %vm59, %v43, 0
    %63 = vmatprep.subr.bf16.mxu0 0
    %64 = vmatpush1.bf16.msra.mxu0 %v57
    %65 = vmatprep.subr.bf16.mxu0 0
    %66 = vmatpush1.bf16.msra.mxu0 0
    %67 = vmatprep.subr.bf16.mxu0 0
    %68 = vmatpush1.bf16.msra.mxu0 0
    %69 = vmatprep.subr.bf16.mxu0 0
    %70 = vmatpush1.bf16.msra.mxu0 0
    %71 = vmatprep.subr.bf16.mxu0 0
    %72 = vmatpush1.bf16.msra.mxu0 0
    %73 = vmatprep.subr.bf16.mxu0 0
    %74 = vmatpush1.bf16.msra.mxu0 0
    %75 = vmatprep.subr.bf16.mxu0 0
    %76 = vmatpush1.bf16.msra.mxu0 0
    %77 = vmatprep.subr.bf16.mxu0 0
    %78 = vmatpush1.bf16.msra.mxu0 0
    %79 = vmatprep.subr.bf16.mxu0 0
    %80 = vmatpush1.bf16.msra.mxu0 0
    %81 = vmatprep.subr.bf16.mxu0 0
    %82 = vmatpush1.bf16.msra.mxu0 0
    %83 = vmatprep.subr.bf16.mxu0 0
    %84 = vmatpush1.bf16.msra.mxu0 0
    %85 = vmatprep.subr.bf16.mxu0 0
    %86 = vmatpush1.bf16.msra.mxu0 0
    %87 = vmatprep.subr.bf16.mxu0 0
    %88 = vmatpush1.bf16.msra.mxu0 0
    %89 = vmatprep.subr.bf16.mxu0 0
    %90 = vmatpush1.bf16.msra.mxu0 0
    %91 = vmatprep.subr.bf16.mxu0 0
    %92 = vmatpush1.bf16.msra.mxu0 0
    %93 = vmatprep.subr.bf16.mxu0 0
    %94 = vmatpush1.bf16.msra.mxu0 0
    %95 = vmatprep.mubr.bf16.mxu0 0
    %96 = vmatmul.mubr.bf16.gmra.mrb[0].mxu0 %v61
    %v97 = vpop.f32.mrb[0].mxu0
    %v98 = vadd.f32 %v51, %v97
    %v99 = vpop.f32.mrb[0].mxu0
    %v100 = vpop.f32.mrb[0].mxu0
    %v101 = vpop.f32.mrb[0].mxu0
    %102 = vdwg.mxu0
    %vm103 = vcmp.gt.f32.partialorder %v98, 0.0
    %v104 = vmul.f32 %v98, 0.01
    %v105 = vsel %vm103, %v98, %v104
    %v106 = vpack.c.bf16 %v105, %v105
    %v107 = vld [vmem:[%s3] sm:$0xf]
    %v108 = vld [vmem:[%s3 + $0x4] sm:$0xf]
    %v109 = vld [vmem:[%s3 + $0x8] sm:$0xf]
    %v110 = vld [vmem:[%s3 + $0xc] sm:$0xf]
    %v111 = vld [vmem:[%s3 + $0x10] sm:$0xf]
    %v112 = vld [vmem:[%s3 + $0x14] sm:$0xf]
    %v113 = vld [vmem:[%s3 + $0x18] sm:$0xf]
    %v114 = vld [vmem:[%s3 + $0x1c] sm:$0xf]
    %v115 = vld [vmem:[%s3 + $0x20] sm:$0xf]
    %v116 = vld [vmem:[%s3 + $0x24] sm:$0xf]
    %v117 = vld [vmem:[%s3 + $0x28] sm:$0xf]
    %v118 = vld [vmem:[%s3 + $0x2c] sm:$0xf]
    %v119 = vld [vmem:[%s3 + $0x30] sm:$0xf]
    %v120 = vld [vmem:[%s3 + $0x34] sm:$0xf]
    %v121 = vld [vmem:[%s3 + $0x38] sm:$0xf]
    %v122 = vld [vmem:[%s3 + $0x3c] sm:$0xf]
    %v123 = vld [vmem:[%s4] sm:$0x1]
    %v125 = vlaneseq
    %v126 = vshrl.u32 %v125, 7
    %v127 = vsub.s32 0, %v126
    %v128 = vrot.slane %v123, %v127
    %v146 = vunpack.c.l.b16 %v107
    %v147 = vunpack.c.l.b16 %v108
    %v148 = vunpack.c.l.b16 %v109
    %v149 = vunpack.c.l.b16 %v110
    %v150 = vunpack.c.l.b16 %v111
    %v151 = vunpack.c.l.b16 %v112
    %v152 = vunpack.c.l.b16 %v113
    %v153 = vunpack.c.l.b16 %v114
    %v154 = vunpack.c.l.b16 %v115
    %v155 = vunpack.c.l.b16 %v116
    %v156 = vunpack.c.l.b16 %v117
    %v157 = vunpack.c.l.b16 %v118
    %v158 = vunpack.c.l.b16 %v119
    %v159 = vunpack.c.l.b16 %v120
    %v160 = vunpack.c.l.b16 %v121
    %v161 = vunpack.c.l.b16 %v122
    %v162 = vpack.c.b16 %v147, %v146
    %v163 = vpack.c.b16 %v149, %v148
    %v164 = vpack.c.b16 %v151, %v150
    %v165 = vpack.c.b16 %v153, %v152
    %v166 = vpack.c.b16 %v155, %v154
    %v167 = vpack.c.b16 %v157, %v156
    %v168 = vpack.c.b16 %v159, %v158
    %v169 = vpack.c.b16 %v161, %v160
    %178 = vmatprep.subr.bf16.mxu0 0
    %179 = vmatpush1.bf16.msra.mxu0 %v162
    %180 = vmatprep.subr.bf16.mxu0 0
    %181 = vmatpush1.bf16.msra.mxu0 %v163
    %182 = vmatprep.subr.bf16.mxu0 0
    %183 = vmatpush1.bf16.msra.mxu0 %v164
    %184 = vmatprep.subr.bf16.mxu0 0
    %185 = vmatpush1.bf16.msra.mxu0 %v165
    %186 = vmatprep.subr.bf16.mxu0 0
    %187 = vmatpush1.bf16.msra.mxu0 %v166
    %188 = vmatprep.subr.bf16.mxu0 0
    %189 = vmatpush1.bf16.msra.mxu0 %v167
    %190 = vmatprep.subr.bf16.mxu0 0
    %191 = vmatpush1.bf16.msra.mxu0 %v168
    %192 = vmatprep.subr.bf16.mxu0 0
    %193 = vmatpush1.bf16.msra.mxu0 %v169
    %194 = vmatprep.subr.bf16.mxu0 0
    %195 = vmatpush1.bf16.msra.mxu0 0
    %196 = vmatprep.subr.bf16.mxu0 0
    %197 = vmatpush1.bf16.msra.mxu0 0
    %198 = vmatprep.subr.bf16.mxu0 0
    %199 = vmatpush1.bf16.msra.mxu0 0
    %200 = vmatprep.subr.bf16.mxu0 0
    %201 = vmatpush1.bf16.msra.mxu0 0
    %202 = vmatprep.subr.bf16.mxu0 0
    %203 = vmatpush1.bf16.msra.mxu0 0
    %204 = vmatprep.subr.bf16.mxu0 0
    %205 = vmatpush1.bf16.msra.mxu0 0
    %206 = vmatprep.subr.bf16.mxu0 0
    %207 = vmatpush1.bf16.msra.mxu0 0
    %208 = vmatprep.subr.bf16.mxu0 0
    %209 = vmatpush1.bf16.msra.mxu0 0
    %210 = vmatprep.mubr.bf16.mxu0 0
    %211 = vmatmul.mubr.bf16.gmra.mrb[0].mxu0 %v106
    %v212 = vpop.f32.mrb[0].mxu0
    %v213 = vadd.f32 %v128, %v212
    %v214 = vpop.f32.mrb[0].mxu0
    %v215 = vpop.f32.mrb[0].mxu0
    %v216 = vpop.f32.mrb[0].mxu0
    %217 = vdwg.mxu0
    %vm218 = vcmp.gt.f32.partialorder %v213, 0.0
    %v219 = vmul.f32 %v213, 0.01
    %v220 = vsel %vm218, %v213, %v219
    %v221 = vpack.c.bf16 %v220, %v220
    %v222 = vld [vmem:[%s5] sm:$0xf]
    %v223 = vld [vmem:[%s5 + $0x4] sm:$0xf]
    %v224 = vld [vmem:[%s5 + $0x8] sm:$0xf]
    %v225 = vld [vmem:[%s5 + $0xc] sm:$0xf]
    %v226 = vld [vmem:[%s5 + $0x10] sm:$0xf]
    %v227 = vld [vmem:[%s5 + $0x14] sm:$0xf]
    %v228 = vld [vmem:[%s5 + $0x18] sm:$0xf]
    %v229 = vld [vmem:[%s5 + $0x1c] sm:$0xf]
    %v230 = vld [vmem:[%s5 + $0x20] sm:$0xf]
    %v231 = vld [vmem:[%s5 + $0x24] sm:$0xf]
    %v232 = vld [vmem:[%s5 + $0x28] sm:$0xf]
    %v233 = vld [vmem:[%s5 + $0x2c] sm:$0xf]
    %v234 = vld [vmem:[%s5 + $0x30] sm:$0xf]
    %v235 = vld [vmem:[%s5 + $0x34] sm:$0xf]
    %v236 = vld [vmem:[%s5 + $0x38] sm:$0xf]
    %v237 = vld [vmem:[%s5 + $0x3c] sm:$0xf]
    %v238 = vld [vmem:[%s6] sm:$0x1]
    %v240 = vlaneseq
    %v241 = vshrl.u32 %v240, 7
    %v242 = vsub.s32 0, %v241
    %v243 = vrot.slane %v238, %v242
    %v261 = vunpack.c.l.b16 %v222
    %v262 = vunpack.c.l.b16 %v223
    %v263 = vunpack.c.l.b16 %v224
    %v264 = vunpack.c.l.b16 %v225
    %v265 = vunpack.c.l.b16 %v226
    %v266 = vunpack.c.l.b16 %v227
    %v267 = vunpack.c.l.b16 %v228
    %v268 = vunpack.c.l.b16 %v229
    %v269 = vunpack.c.l.b16 %v230
    %v270 = vunpack.c.l.b16 %v231
    %v271 = vunpack.c.l.b16 %v232
    %v272 = vunpack.c.l.b16 %v233
    %v273 = vunpack.c.l.b16 %v234
    %v274 = vunpack.c.l.b16 %v235
    %v275 = vunpack.c.l.b16 %v236
    %v276 = vunpack.c.l.b16 %v237
    %v277 = vpack.c.b16 %v262, %v261
    %v278 = vpack.c.b16 %v264, %v263
    %v279 = vpack.c.b16 %v266, %v265
    %v280 = vpack.c.b16 %v268, %v267
    %v281 = vpack.c.b16 %v270, %v269
    %v282 = vpack.c.b16 %v272, %v271
    %v283 = vpack.c.b16 %v274, %v273
    %v284 = vpack.c.b16 %v276, %v275
    %293 = vmatprep.subr.bf16.mxu0 0
    %294 = vmatpush1.bf16.msra.mxu0 %v277
    %295 = vmatprep.subr.bf16.mxu0 0
    %296 = vmatpush1.bf16.msra.mxu0 %v278
    %297 = vmatprep.subr.bf16.mxu0 0
    %298 = vmatpush1.bf16.msra.mxu0 %v279
    %299 = vmatprep.subr.bf16.mxu0 0
    %300 = vmatpush1.bf16.msra.mxu0 %v280
    %301 = vmatprep.subr.bf16.mxu0 0
    %302 = vmatpush1.bf16.msra.mxu0 %v281
    %303 = vmatprep.subr.bf16.mxu0 0
    %304 = vmatpush1.bf16.msra.mxu0 %v282
    %305 = vmatprep.subr.bf16.mxu0 0
    %306 = vmatpush1.bf16.msra.mxu0 %v283
    %307 = vmatprep.subr.bf16.mxu0 0
    %308 = vmatpush1.bf16.msra.mxu0 %v284
    %309 = vmatprep.subr.bf16.mxu0 0
    %310 = vmatpush1.bf16.msra.mxu0 0
    %311 = vmatprep.subr.bf16.mxu0 0
    %312 = vmatpush1.bf16.msra.mxu0 0
    %313 = vmatprep.subr.bf16.mxu0 0
    %314 = vmatpush1.bf16.msra.mxu0 0
    %315 = vmatprep.subr.bf16.mxu0 0
    %316 = vmatpush1.bf16.msra.mxu0 0
    %317 = vmatprep.subr.bf16.mxu0 0
    %318 = vmatpush1.bf16.msra.mxu0 0
    %319 = vmatprep.subr.bf16.mxu0 0
    %320 = vmatpush1.bf16.msra.mxu0 0
    %321 = vmatprep.subr.bf16.mxu0 0
    %322 = vmatpush1.bf16.msra.mxu0 0
    %323 = vmatprep.subr.bf16.mxu0 0
    %324 = vmatpush1.bf16.msra.mxu0 0
    %325 = vmatprep.mubr.bf16.mxu0 0
    %326 = vmatmul.mubr.bf16.gmra.mrb[0].mxu0 %v221
    %v327 = vpop.f32.mrb[0].mxu0
    %v328 = vadd.f32 %v243, %v327
    %v329 = vpop.f32.mrb[0].mxu0
    %v330 = vpop.f32.mrb[0].mxu0
    %v331 = vpop.f32.mrb[0].mxu0
    %332 = vdwg.mxu0
    %vm333 = vcmask 64512
    %v334 = vsel %vm333, %v328, -inf
    %335 = vmax.xlane.f32.xlu0 %v334
    %v336 = vpop.xlane.xlu0 %335
    %v337 = vsub.f32 %v328, %v336
    %v338 = vmul.f32 %v337, 1.442695
    %v339 = vpow.pop %v338
    %v340 = vsel %vm333, %v339, 0.0
    %341 = vadd.xlane.f32.xlu0 %v340
    %v342 = vpop.xlane.xlu0 %341
    %v343 = vrcp.pop %v342
    %v344 = vmul.f32 %v339, %v343
    %345 = vst.msk [vmem:[#allocation5] sm:$0xff] %vm333, %v344
    // Predicated region
    $region34: #{discrete_policy_probs.1} parent=1 // pred_check
      _
    $region35: #{discrete_policy_probs.1} parent=1 // pred_check_branch
      %347 = sbr.rel (0) target = $region37
    $region36: #{discrete_policy_probs.1} parent=1 // pred_region
      %s349 = ssub.s32 128, 128
      %350 = vsyncadd [#allocation4], %s349
      %s352 = sshll.u32 [#allocation5], 4
      %s353 = int_to_ptr.vmem [resolvable:$true] %s352
      %355 = dma.vmem_to_hbm [thread:$0]  %s353, 128, %s7, [#allocation4]
    $region37: #{discrete_policy_probs.1} parent=1 // pred_fallthru
      _
    // Predicated region
    $region38: #{discrete_policy_probs.1} parent=1 // pred_check
      _
    $region39: #{discrete_policy_probs.1} parent=1 // pred_check_branch
      %357 = sbr.rel (0) target = $region41
    $region40: #{discrete_policy_probs.1} parent=1 // pred_region
      %358 = dma.done [#allocation4], 128
    $region41: #{discrete_policy_probs.1} parent=1 // pred_fallthru
      _
    %359 = vsyncpa [#allocation3], 1
    %360 = vsyncpa [#allocation4], 1

</llo_original>
